<compile_context>
chip_gen: v5e
topology: v5e:2x2
jax: 0.10.0
libtpu: 0.0.40
codegen_flags: <defaults>
</compile_context>

<pallas_src>
import functools

import jax
import jax.numpy as jnp
from jax.experimental import pallas as pl
from jax.experimental.pallas import tpu as pltpu


def _round_up(x: int, m: int) -> int:
    return ((x + m - 1) // m) * m


def _vmem_capacity_bytes() -> int:
    try:
        return int(pltpu.get_tpu_info().vmem_capacity_bytes)
    except Exception:
        return 64 * 1024 * 1024  # conservative (v7x-sized) fallback


def _gcn_kernel(adj_ref, h_ref, *rest, tk: int, h_resident: bool,
                apply_w_after: bool, deg_col: int, out_pad: int):
    """One (row-tile, K-tile) grid step of out = (A @ [h|1]) [@ W] * norm_dst + bias.

    adj_ref : (TM, TK) bf16 adjacency tile (dst rows, src cols).
    h_ref   : (TK, H_PAD) bf16 tile of normalized features + ones-column, or the full
              (N_PAD, H_PAD) array when h_resident (sliced by K in-kernel).
    rest    : [w_ref] (only when apply_w_after), bias_ref, out_ref, acc_ref.
    """
    if apply_w_after:
        w_ref, bias_ref, out_ref, acc_ref = rest
    else:
        w_ref = None
        bias_ref, out_ref, acc_ref = rest

    k = pl.program_id(1)

    @pl.when(k == 0)
    def _init():
        acc_ref[...] = jnp.zeros_like(acc_ref)

    if h_resident:
        start = pl.multiple_of(k * tk, 128)
        h_blk = h_ref[pl.ds(start, tk), :]
    else:
        h_blk = h_ref[...]

    # bf16 x bf16 -> f32 MXU at full rate.  adj values (0/1) and the appended
    # ones-column are exact in bf16, and the in-degree accumulates exactly in
    # the f32 MXU accumulator (no XLU row-reduction, no f32 adj copy).
    acc_ref[...] += jnp.dot(adj_ref[...], h_blk, preferred_element_type=jnp.float32)

    @pl.when(k == pl.num_programs(1) - 1)
    def _finalize():
        # Destination (in-)degree landed in the `deg_col` lane via the ones-column.
        deg = acc_ref[:, deg_col:deg_col + 1]
        norm_dst = jax.lax.rsqrt(jnp.maximum(deg, 1.0))
        if w_ref is not None:
            # aggregate-before-transform: small epilogue matmul, once per row tile.
            rst = jnp.dot(acc_ref[...], w_ref[...], preferred_element_type=jnp.float32)
        else:
            rst = acc_ref[:, :out_pad]
        out_ref[...] = (rst * norm_dst + bias_ref[...]).astype(out_ref.dtype)


def graph_conv(adj, feat, weight, bias, *, tm=1024, tk=1024,
               h_resident_max_bytes=None):
    """GraphConv forward. adj: (N, N) dense with adj[dst, src] = edge indicator."""
    n, in_feats = feat.shape
    out_feats = weight.shape[1]

    # Hardware budgets (v5e/v6e: 128 MiB physical VMEM, v7x: 64 MiB).
    vmem_cap = _vmem_capacity_bytes()
    vmem_limit = min(96 * 1024 * 1024, (vmem_cap * 3) // 4)
    budget = (vmem_limit * 4) // 5
    if h_resident_max_bytes is None:
        h_resident_max_bytes = vmem_limit // 3

    # Source (out-)degree norm, reduced from the ORIGINAL adjacency so XLA can fuse
    # this column-sum with the single bf16 cast/pad pass below (one f32 read of adj).
    out_deg = jnp.sum(adj, axis=0, dtype=jnp.float32)
    norm_src = jax.lax.rsqrt(jnp.maximum(out_deg, 1.0))[:, None]
    feat_n = feat.astype(jnp.float32) * norm_src

    out_pad = _round_up(out_feats, 128)          # lane-dense output stores
    in_gt_out = in_feats > out_feats
    if in_gt_out:
        # Transform first: tiny (N,in)x(in,out) matmul hoisted out of the tile loop.
        h = jnp.dot(feat_n, weight.astype(jnp.float32))      # (N, out_feats)
    else:
        h = feat_n                                            # (N, in_feats)
    h_cols = h.shape[1]
    deg_col = h_cols                  # ones-column lane -> in-degree via the MXU
    h_pad = _round_up(h_cols + 1, 128)
    apply_w_after = not in_gt_out

    # ---- tile sizing -------------------------------------------------------
    n16 = _round_up(n, 16)
    tm = max(16, min(tm, n16))
    if tm == n16 and n16 >= 32:
        # >= 2 row tiles so the "parallel" axis can split across both TensorCores (v7x).
        tm = _round_up((n16 + 1) // 2, 16)
    tk = max(128, min(tk, _round_up(n, 128)))

    def _footprint(tm_, tk_, h_res, n_cols_):
        adj_b = 2 * tm_ * tk_ * 2                                    # 2x bf16 adj tile
        h_b = 2 * (n_cols_ * h_pad if h_res else tk_ * h_pad) * 2    # bf16 features
        w_b = 2 * h_pad * out_pad * 4 if apply_w_after else 0
        bias_b = 2 * out_pad * 4
        out_b = 2 * tm_ * out_pad * 4
        acc_b = tm_ * h_pad * 4
        return adj_b + h_b + w_b + bias_b + out_b + acc_b

    # Shrink tiles / fall back to the streamed-h path if the footprint exceeds budget
    # (guards large feature dims and v7x's smaller VMEM).
    for _ in range(16):
        n_cols = _round_up(n, tk)
        h_resident = (n_cols * h_pad * 2) <= min(h_resident_max_bytes, budget // 2)
        if _footprint(tm, tk, h_resident, n_cols) <= budget:
            break
        if tk > 128:
            tk //= 2
        elif tm > 16:
            tm = max(16, _round_up(tm // 2, 16))
        else:
            break

    n_rows = _round_up(n, tm)
    n_cols = _round_up(n, tk)
    grid = (n_rows // tm, n_cols // tk)

    # Adjacency: 0/1 is exact in bf16 and halves the dominant HBM stream.  The cast
    # and (only-if-needed) pad fuse into a single XLA pass together with out_deg above.
    adj_b = adj.astype(jnp.bfloat16)
    if n_rows != n or n_cols != n:
        adj_b = jnp.pad(adj_b, ((0, n_rows - n), (0, n_cols - n)))

    # Features in bf16 (feed the bf16 MXU directly) with a trailing ones-column whose
    # matmul output is exactly the destination in-degree (f32-accumulated => exact).
    h_aug = jnp.concatenate([h, jnp.ones((n, 1), h.dtype)], axis=1).astype(jnp.bfloat16)
    h_p = jnp.pad(h_aug, ((0, n_cols - n), (0, h_pad - (h_cols + 1))))

    bias_p = jnp.pad(bias.astype(jnp.float32).reshape(1, out_feats),
                     ((0, 0), (0, out_pad - out_feats)))

    if h_resident:
        # Loaded once for the whole grid (constant index map), sliced by K in-kernel.
        h_spec = pl.BlockSpec((n_cols, h_pad), lambda i, k: (0, 0))
    else:
        h_spec = pl.BlockSpec((tk, h_pad), lambda i, k: (k, 0))

    in_specs = [
        pl.BlockSpec((tm, tk), lambda i, k: (i, k)),   # adj tile (bf16)
        h_spec,                                        # normalized features (+ ones)
    ]
    inputs = [adj_b, h_p]
    if apply_w_after:
        # Aggregate-before-transform: kernel applies W in the finalize epilogue.
        w_p = jnp.pad(weight.astype(jnp.float32),
                      ((0, h_pad - in_feats), (0, out_pad - out_feats)))
        in_specs.append(pl.BlockSpec((h_pad, out_pad), lambda i, k: (0, 0)))
        inputs.append(w_p)
    in_specs.append(pl.BlockSpec((1, out_pad), lambda i, k: (0, 0)))  # bias
    inputs.append(bias_p)

    kernel = functools.partial(
        _gcn_kernel, tk=tk, h_resident=h_resident,
        apply_w_after=apply_w_after, deg_col=deg_col, out_pad=out_pad)

    out = pl.pallas_call(
        kernel,
        out_shape=jax.ShapeDtypeStruct((n_rows, out_pad), jnp.float32),
        grid_spec=pltpu.PrefetchScalarGridSpec(
            num_scalar_prefetch=0,
            grid=grid,
            in_specs=in_specs,
            out_specs=pl.BlockSpec((tm, out_pad), lambda i, k: (i, 0)),
            scratch_shapes=[
                pltpu.VMEM((tm, h_pad), jnp.float32),   # A @ [h | 1] accumulator
            ],
        ),
        compiler_params=pltpu.CompilerParams(
            dimension_semantics=("parallel", "arbitrary"),
            vmem_limit_bytes=int(vmem_limit),
        ),
    )(*inputs)

    return out[:n, :out_feats]


def _reference(adj, feat, weight, bias):
    """Pure-JAX reference matching the PyTorch forward."""
    out_deg = jnp.maximum(jnp.sum(adj, axis=0), 1.0)
    in_deg = jnp.maximum(jnp.sum(adj, axis=1), 1.0)
    f = feat * jnp.power(out_deg, -0.5)[:, None]
    if feat.shape[1] > weight.shape[1]:
        rst = adj @ (f @ weight)
    else:
        rst = (adj @ f) @ weight
    rst = rst * jnp.power(in_deg, -0.5)[:, None]
    return rst + bias


if __name__ == "__main__":
    def make_case(key, n, in_feats, out_feats, density=0.1):
        k_adj, k_feat, k_w, k_b = jax.random.split(key, 4)
        adj = (jax.random.uniform(k_adj, (n, n)) < density).astype(jnp.float32)
        feat = jax.random.normal(k_feat, (n, in_feats), dtype=jnp.float32)
        bound = (6.0 / (in_feats + out_feats)) ** 0.5    # Glorot uniform
        weight = jax.random.uniform(k_w, (in_feats, out_feats),
                                    minval=-bound, maxval=bound, dtype=jnp.float32)
        bias = 0.1 * jax.random.normal(k_b, (out_feats,), dtype=jnp.float32)
        return adj, feat, weight, bias

    k1, k2 = jax.random.split(jax.random.PRNGKey(0))

    # Tolerance accounts for bf16 MXU inputs (adj 0/1 is exact; features are
    # bf16-rounded) with f32 accumulation vs the f32 XLA reference.
    TOL = dict(atol=2e-2, rtol=2e-2)

    # Case 1: in_feats > out_feats (transform-before-aggregate), multi-tile (2x2)
    # grid, VMEM-resident features.
    adj, feat, w, b = make_case(k1, n=256, in_feats=64, out_feats=16)
    out = jax.block_until_ready(graph_conv(adj, feat, w, b, tm=128, tk=128))
    ref = _reference(adj, feat, w, b)
    assert out.shape == ref.shape
    assert jnp.allclose(out, ref, **TOL), float(jnp.max(jnp.abs(out - ref)))

    # Case 2: in_feats <= out_feats (aggregate-before-transform, W applied in the
    # kernel epilogue), ragged N exercising padding, streamed-features path (forced).
    adj, feat, w, b = make_case(k2, n=300, in_feats=16, out_feats=32)
    out = jax.block_until_ready(
        graph_conv(adj, feat, w, b, tm=128, tk=128, h_resident_max_bytes=0))
    ref = _reference(adj, feat, w, b)
    assert out.shape == ref.shape
    assert jnp.allclose(out, ref, **TOL), float(jnp.max(jnp.abs(out - ref)))

    print("KERNEL_OK")
</pallas_src>

<mosaic_0001>
module attributes {stable_mosaic.version = 11 : i64} {
  func.func @_gcn_kernel(%arg0: i32, %arg1: i32, %arg2: memref<128x128xbf16, #tpu.memory_space<vmem>>, %arg3: memref<256x128xbf16, #tpu.memory_space<vmem>>, %arg4: memref<1x128xf32, #tpu.memory_space<vmem>>, %arg5: memref<128x128xf32, #tpu.memory_space<vmem>>, %arg6: memref<128x128xf32, #tpu.memory_space<vmem>>) attributes {dimension_semantics = [#tpu.dimension_semantics<parallel>, #tpu.dimension_semantics<arbitrary>], iteration_bounds = array<i64: 2, 2>, scalar_prefetch = 0 : i64, scratch_operands = 1 : i64, tpu.core_type = #tpu.core_type<tc>, window_params = [{transform_indices = @transform_0, window_bounds = array<i64: 128, 128>}, {pipeline_mode = #tpu.pipeline_mode<synchronous>, transform_indices = @transform_1, window_bounds = array<i64: 256, 128>}, {pipeline_mode = #tpu.pipeline_mode<synchronous>, transform_indices = @transform_2, window_bounds = array<i64: 1, 128>}, {transform_indices = @transform_3, window_bounds = array<i64: 128, 128>}]} {
    %c0_i32 = arith.constant 0 : i32
    %0 = arith.cmpi eq, %arg1, %c0_i32 : i32
    %1 = arith.extui %0 : i1 to i32
    %c0_i32_0 = arith.constant 0 : i32
    %2 = arith.cmpi ne, %1, %c0_i32_0 : i32
    scf.if %2 {
      %cst_8 = arith.constant 0.000000e+00 : f32
      %15 = vector.broadcast %cst_8 : f32 to vector<128x128xf32>
      %c0_9 = arith.constant 0 : index
      %c0_10 = arith.constant 0 : index
      %16 = vector.load %arg6[%c0_9, %c0_10] : memref<128x128xf32, #tpu.memory_space<vmem>>, vector<128x128xf32>
      tpu.vector_store %arg6[%c0_9, %c0_10], %15 {strides = array<i32>} : memref<128x128xf32, #tpu.memory_space<vmem>>, vector<128x128xf32>,
    } else {
    }
    %c128_i32 = arith.constant 128 : i32
    %3 = arith.muli %arg1, %c128_i32 : i32
    %4 = tpu.assume_multiple %3, 128 : i32
    %5 = arith.index_cast %4 : i32 to index
    %c0 = arith.constant 0 : index
    %6 = vector.load %arg3[%5, %c0] : memref<256x128xbf16, #tpu.memory_space<vmem>>, vector<128x128xbf16>
    %c0_1 = arith.constant 0 : index
    %c0_2 = arith.constant 0 : index
    %7 = vector.load %arg6[%c0_1, %c0_2] : memref<128x128xf32, #tpu.memory_space<vmem>>, vector<128x128xf32>
    %c0_3 = arith.constant 0 : index
    %c0_4 = arith.constant 0 : index
    %8 = vector.load %arg2[%c0_3, %c0_4] : memref<128x128xbf16, #tpu.memory_space<vmem>>, vector<128x128xbf16>
    %cst = arith.constant dense<0.000000e+00> : vector<128x128xf32>
    %9 = tpu.matmul %8, %6, %cst {dimension_numbers = #tpu.dot_dimension_numbers<[1], [0], [0], [1], [0, 0, 1, 1], [], []>} : vector<128x128xbf16>, vector<128x128xbf16>, vector<128x128xf32> -> vector<128x128xf32>
    %10 = arith.addf %7, %9 : vector<128x128xf32>
    %c0_5 = arith.constant 0 : index
    %c0_6 = arith.constant 0 : index
    %11 = vector.load %arg6[%c0_5, %c0_6] : memref<128x128xf32, #tpu.memory_space<vmem>>, vector<128x128xf32>
    tpu.vector_store %arg6[%c0_5, %c0_6], %10 {strides = array<i32>} : memref<128x128xf32, #tpu.memory_space<vmem>>, vector<128x128xf32>,
    %c1_i32 = arith.constant 1 : i32
    %12 = arith.cmpi eq, %arg1, %c1_i32 : i32
    %13 = arith.extui %12 : i1 to i32
    %c0_i32_7 = arith.constant 0 : i32
    %14 = arith.cmpi ne, %13, %c0_i32_7 : i32
    scf.if %14 {
      %c0_8 = arith.constant 0 : index
      %c16 = arith.constant 16 : index
      %15 = vector.load %arg6[%c0_8, %c16] : memref<128x128xf32, #tpu.memory_space<vmem>>, vector<128x1xf32>
      %cst_9 = arith.constant 1.000000e+00 : f32
      %16 = vector.broadcast %cst_9 : f32 to vector<128x1xf32>
      %17 = arith.maximumf %15, %16 : vector<128x1xf32>
      %18 = math.rsqrt %17 : vector<128x1xf32>
      %c0_10 = arith.constant 0 : index
      %c0_11 = arith.constant 0 : index
      %19 = vector.load %arg6[%c0_10, %c0_11] : memref<128x128xf32, #tpu.memory_space<vmem>>, vector<128x128xf32>
      %20 = vector.broadcast %18 : vector<128x1xf32> to vector<128x128xf32>
      %21 = arith.mulf %19, %20 : vector<128x128xf32>
      %c0_12 = arith.constant 0 : index
      %c0_13 = arith.constant 0 : index
      %22 = vector.load %arg4[%c0_12, %c0_13] : memref<1x128xf32, #tpu.memory_space<vmem>>, vector<1x128xf32>
      %23 = vector.broadcast %22 : vector<1x128xf32> to vector<128x128xf32>
      %24 = arith.addf %21, %23 : vector<128x128xf32>
      %c0_14 = arith.constant 0 : index
      %c0_15 = arith.constant 0 : index
      %25 = vector.load %arg5[%c0_14, %c0_15] : memref<128x128xf32, #tpu.memory_space<vmem>>, vector<128x128xf32>
      tpu.vector_store %arg5[%c0_14, %c0_15], %24 {strides = array<i32>} : memref<128x128xf32, #tpu.memory_space<vmem>>, vector<128x128xf32>,
    } else {
    }
    return
  }
  func.func @transform_0(%arg0: i32, %arg1: i32) -> (i32, i32) {
    %c0_i32 = arith.constant 0 : i32
    return %arg0, %arg1 : i32, i32
  }
  func.func @transform_1(%arg0: i32, %arg1: i32) -> (i32, i32) {
    %c0_i32 = arith.constant 0 : i32
    %c0_i32_0 = arith.constant 0 : i32
    %c0_i32_1 = arith.constant 0 : i32
    return %c0_i32, %c0_i32_0 : i32, i32
  }
  func.func @transform_2(%arg0: i32, %arg1: i32) -> (i32, i32) {
    %c0_i32 = arith.constant 0 : i32
    %c0_i32_0 = arith.constant 0 : i32
    %c0_i32_1 = arith.constant 0 : i32
    return %c0_i32, %c0_i32_0 : i32, i32
  }
  func.func @transform_3(%arg0: i32, %arg1: i32) -> (i32, i32) {
    %c0_i32 = arith.constant 0 : i32
    %c0_i32_0 = arith.constant 0 : i32
    return %arg0, %c0_i32 : i32, i32
  }
}

</mosaic_0001>

<llo_original>
// kernel: tpu_custom_call.1
$region0: #{tpu_custom_call.1}
  #allocation0 [shape = 'u32[]', space=smem, size = 0x4, offset = 0x4, fixed_abs, tag = 'smem constant byte address 0x4 - core index']
  #allocation1 [shape = 'u32[72,128]{1,0:T(1,128)}', space=vmem, size = 0x9000, scoped, tag = 'internal scratch']
  #allocation2 [shape = 'f32[128,128]{1,0:T(8,128)}', space=vmem, size = 0x10000, scoped, tag = 'scratch operand']
  %s0 = inlined_call_operand.hbm [shape: bf16[256,256], index: 0, kind: input, shape index: {}]
  %s1 = inlined_call_operand.hbm [shape: bf16[256,128], index: 1, kind: input, shape index: {}]
  %s2 = inlined_call_operand.vmem [shape: f32[1,128], index: 2, kind: input, shape index: {}]
  %s3 = inlined_call_operand.hbm [shape: f32[256,128], index: 3, kind: output, shape index: {}]
  %s4 = sld [smem:[#allocation0]]
  $region61: #{tpu_custom_call.1} parent=0
    _
  %s6 = ssub.s32 1, %s4
  %s7 = scalar_select 0, %s6, %s4
  $region1: #{tpu_custom_call.1} parent=0
    #allocation3 [shape = 'u8[65536]{0}', space=vmem, size = 0x10000, scoped, tag = 'input window, operand 0']
    #allocation4 [shape = 's32[2]{0}', space=sflag, size = 0x8, scoped, tag = 'scoped memory for tpu_custom_call.1']
    #allocation5 [shape = 's32[2]{0}', space=sflag, size = 0x8, scoped, tag = 'scoped memory for tpu_custom_call.1']
    #allocation6 [shape = 'u8[65536]{0}', space=vmem, size = 0x10000, scoped, tag = 'input window, operand 1, single buffered']
    #allocation7 [shape = 's32[1]{0}', space=sflag, size = 0x4, scoped, tag = 'scoped memory for tpu_custom_call.1']
    #allocation8 [shape = 'u8[131072]{0}', space=vmem, size = 0x20000, scoped, tag = 'output window, operand 0']
    %8 = vsyncpa [#allocation4], 0
    %s9 = scalar_lea.sflag [#allocation4], 1
    %10 = vsyncpa %s9, 0
    %11 = vsyncpa [#allocation7], 0
    %12 = vsyncpa [#allocation5], 0
    %s13 = scalar_lea.sflag [#allocation5], 1
    %14 = vsyncpa %s13, 0
    loop: start=0, step=1, limit=6
    $region2: #{tpu_custom_call.1} parent=1 // loop_pre_header
      _
    $region3: #{tpu_custom_call.1} parent=1 // loop_header
      %s16 = sphi 0, %s20
      %p17 = scmp.ge.s32.totalorder %s16, 6
      %s23 = sphi 0, %s35
      %s24 = sphi 0, %s31
      %s25 = sphi 0, %s23
      %s26 = sphi 0, %s24
      %s27 = sphi 0, %s25
      %s28 = sphi 0, %s26
      %s40 = sphi 0, %s42
      %s43 = sphi 0, %s40
      %s44 = sphi 0, %s43
      %s60 = sphi 0, %s44
      %s64 = sphi 0, %s64
      %s66 = sphi 0, %s64
      %s67 = sphi 0, %s66
      %s81 = sphi 0, %s67
      %s85 = sphi 0, %s85
      %s87 = sphi 0, %s85
      %s88 = sphi 0, %s87
      %s102 = sphi 0, %s88
      %s108 = sphi 0, %s110
      %s111 = sphi 0, %s108
      %s112 = sphi 0, %s111
      %s128 = sphi 0, %s112
    $region4: #{tpu_custom_call.1} parent=1 // loop_header_branch
      %19 = sbr.rel (%p17) target = $region8
    $region5: #{tpu_custom_call.1} parent=1 // loop_body
      %s21 = ssub.s32 %s16, 1
      %s22 = ssub.s32 %s16, 2
      %s29 = sadd.s32 1, %s24
      %p30 = scmp.ge.s32.totalorder %s29, 2
      %s31 = scalar_select %p30, 0, %s29
      %s32 = sadd.s32 1, %s23
      %s33 = scalar_select %p30, %s32, %s23
      %p34 = scmp.ge.s32.totalorder %s33, 2
      %s35 = scalar_select %p34, 0, %s33
      %s36 = ssub.s32 %s23, %s35
      %s37 = ssub.s32 %s24, %s31
      %s38 = sor.u32 %s36, %s37
      %p39 = scmp.eq.s32.totalorder %s38, 0
      %s41 = sadd.s32 %s40, 1
      %s42 = scalar_select %p39, %s40, %s41
      %p45 = pneg %p39
      %p46 = scmp.eq.s32.totalorder %s16, 3
      %p47 = por %p45, %p46
      %p48 = scmp.ne.s32.totalorder %s40, %s43
      %p49 = scmp.eq.s32.totalorder %s16, 0
      %p50 = por %p48, %p49
      %p51 = scmp.ne.s32.totalorder %s40, %s43
      %p52 = scmp.eq.s32.totalorder %s21, 3
      %p53 = por %p51, %p52
      %p54 = scmp.ne.s32.totalorder %s43, %s44
      %p55 = scmp.eq.s32.totalorder %s21, 0
      %p56 = por %p54, %p55
      %p57 = scmp.ne.s32.totalorder %s43, %s44
      %p58 = scmp.eq.s32.totalorder %s22, 3
      %p59 = por %p57, %p58
      %p61 = scmp.ne.s32.totalorder %s44, %s60
      %p62 = scmp.eq.s32.totalorder %s22, 0
      %p63 = por %p61, %p62
      %s65 = sadd.s32 %s64, 1
      %p68 = scmp.eq.s32.totalorder %s16, 3
      %p69 = scmp.ne.s32.totalorder %s64, %s66
      %p70 = scmp.eq.s32.totalorder %s16, 0
      %p71 = por %p69, %p70
      %p72 = scmp.ne.s32.totalorder %s64, %s66
      %p73 = scmp.eq.s32.totalorder %s21, 3
      %p74 = por %p72, %p73
      %p75 = scmp.ne.s32.totalorder %s66, %s67
      %p76 = scmp.eq.s32.totalorder %s21, 0
      %p77 = por %p75, %p76
      %p78 = scmp.ne.s32.totalorder %s66, %s67
      %p79 = scmp.eq.s32.totalorder %s22, 3
      %p80 = por %p78, %p79
      %p82 = scmp.ne.s32.totalorder %s67, %s81
      %p83 = scmp.eq.s32.totalorder %s22, 0
      %p84 = por %p82, %p83
      %s86 = sadd.s32 %s85, 1
      %p89 = scmp.eq.s32.totalorder %s16, 3
      %p90 = scmp.ne.s32.totalorder %s85, %s87
      %p91 = scmp.eq.s32.totalorder %s16, 0
      %p92 = por %p90, %p91
      %p93 = scmp.ne.s32.totalorder %s85, %s87
      %p94 = scmp.eq.s32.totalorder %s21, 3
      %p95 = por %p93, %p94
      %p96 = scmp.ne.s32.totalorder %s87, %s88
      %p97 = scmp.eq.s32.totalorder %s21, 0
      %p98 = por %p96, %p97
      %p99 = scmp.ne.s32.totalorder %s87, %s88
      %p100 = scmp.eq.s32.totalorder %s22, 3
      %p101 = por %p99, %p100
      %p103 = scmp.ne.s32.totalorder %s88, %s102
      %p104 = scmp.eq.s32.totalorder %s22, 0
      %p105 = por %p103, %p104
      %s106 = ssub.s32 %s23, %s35
      %p107 = scmp.eq.s32.totalorder %s106, 0
      %s109 = sadd.s32 %s108, 1
      %s110 = scalar_select %p107, %s108, %s109
      %p113 = pneg %p107
      %p114 = scmp.eq.s32.totalorder %s16, 3
      %p115 = por %p113, %p114
      %p116 = scmp.ne.s32.totalorder %s108, %s111
      %p117 = scmp.eq.s32.totalorder %s16, 0
      %p118 = por %p116, %p117
      %p119 = scmp.ne.s32.totalorder %s108, %s111
      %p120 = scmp.eq.s32.totalorder %s21, 3
      %p121 = por %p119, %p120
      %p122 = scmp.ne.s32.totalorder %s111, %s112
      %p123 = scmp.eq.s32.totalorder %s21, 0
      %p124 = por %p122, %p123
      %p125 = scmp.ne.s32.totalorder %s111, %s112
      %p126 = scmp.eq.s32.totalorder %s22, 3
      %p127 = por %p125, %p126
      %p129 = scmp.ne.s32.totalorder %s112, %s128
      %p130 = scmp.eq.s32.totalorder %s22, 0
      %p131 = por %p129, %p130
      %p132 = scmp.le.s32.totalorder 1, %s16
      %p133 = scmp.lt.s32.totalorder %s16, 5
      %p134 = pnand %p132, %p133
      %p135 = pneg %p134
      // Predicated region
      $region9: #{tpu_custom_call.1} parent=5 // pred_check
        _
      $region10: #{tpu_custom_call.1} parent=5 // pred_check_branch
        %137 = sbr.rel (%p134) target = $region12
      $region11: #{tpu_custom_call.1} parent=5 // pred_region
        %s138 = ssub.s32 %s16, 1
        // Predicated region
        $region13: #{tpu_custom_call.1} parent=11 // pred_check
          %p139 = pneg %p77
        $region14: #{tpu_custom_call.1} parent=11 // pred_check_branch
          %141 = sbr.rel (%p139) target = $region16
        $region15: #{tpu_custom_call.1} parent=11 // pred_region
          %143 = vsyncadd [#allocation7], 0
          %s144 = sshll.u32 %s1, 4
          %s145 = int_to_ptr.hbm [resolvable:$true] %s144
          %s146 = sshll.u32 [#allocation6], 4
          %s147 = int_to_ptr.vmem [resolvable:$true] %s146
          %152 = dma.hbm_to_vmem [thread:$0]  %s145, 2048, %s147, [#allocation7], 64, 64, 4
        $region16: #{tpu_custom_call.1} parent=11 // pred_fallthru
          _
        // Predicated region
        $region17: #{tpu_custom_call.1} parent=11 // pred_check
          %p153 = pneg %p98
        $region18: #{tpu_custom_call.1} parent=11 // pred_check_branch
          %155 = sbr.rel (%p153) target = $region20
        $region19: #{tpu_custom_call.1} parent=11 // pred_region
          _
        $region20: #{tpu_custom_call.1} parent=11 // pred_fallthru
          _
      $region12: #{tpu_custom_call.1} parent=5 // pred_fallthru
        _
      %p156 = scmp.lt.s32.totalorder %s16, 4
      // Predicated region
      $region21: #{tpu_custom_call.1} parent=5 // pred_check
        %p157 = pneg %p156
      $region22: #{tpu_custom_call.1} parent=5 // pred_check_branch
        %159 = sbr.rel (%p157) target = $region24
      $region23: #{tpu_custom_call.1} parent=5 // pred_region
        // Predicated region
        $region25: #{tpu_custom_call.1} parent=23 // pred_check
          %p160 = pneg %p50
        $region26: #{tpu_custom_call.1} parent=23 // pred_check_branch
          %162 = sbr.rel (%p160) target = $region28
        $region27: #{tpu_custom_call.1} parent=23 // pred_region
          %s163 = sand.u32 %s40, 1
          %s164 = scalar_lea.sflag [#allocation4], %s163
          %s165 = sand.u32 %s40, 1
          %s166 = smul.addr %s165, 64
          %s167 = scalar_lea.vmem [#allocation3], %s166
          %s168 = smul.u32 16, %s23
          %170 = vsyncadd %s164, 0
          %s171 = smul.addr %s168, 2
          %s172 = sadd.s32 %s24, %s171
          %s173 = smul.addr %s172, 4
          %s174 = scalar_lea.hbm %s0, %s173
          %s175 = sshll.u32 %s174, 4
          %s176 = int_to_ptr.hbm [resolvable:$true] %s175
          %s177 = sshll.u32 %s167, 4
          %s178 = int_to_ptr.vmem [resolvable:$true] %s177
          %183 = dma.hbm_to_vmem [thread:$0]  %s176, 1024, %s178, %s164, 128, 64, 4
        $region28: #{tpu_custom_call.1} parent=23 // pred_fallthru
          _
      $region24: #{tpu_custom_call.1} parent=5 // pred_fallthru
        _
      %p184 = scmp.le.s32.totalorder 1, %s16
      %p185 = scmp.lt.s32.totalorder %s16, 5
      %p186 = pnand %p184, %p185
      %p187 = pneg %p186
      // Predicated region
      $region29: #{tpu_custom_call.1} parent=5 // pred_check
        _
      $region30: #{tpu_custom_call.1} parent=5 // pred_check_branch
        %189 = sbr.rel (%p186) target = $region32
      $region31: #{tpu_custom_call.1} parent=5 // pred_region
        %s190 = ssub.s32 %s16, 1
        %s191 = sand.u32 %s43, 1
        %s192 = scalar_lea.sflag [#allocation4], %s191
        %s193 = sand.u32 %s43, 1
        %s194 = smul.addr %s193, 64
        %s195 = scalar_lea.vmem [#allocation3], %s194
        // Predicated region
        $region33: #{tpu_custom_call.1} parent=31 // pred_check
          %p196 = pneg %p56
        $region34: #{tpu_custom_call.1} parent=31 // pred_check_branch
          %198 = sbr.rel (%p196) target = $region36
        $region35: #{tpu_custom_call.1} parent=31 // pred_region
          %200 = dma.done %s192, 1024
        $region36: #{tpu_custom_call.1} parent=31 // pred_fallthru
          _
        // Predicated region
        $region37: #{tpu_custom_call.1} parent=31 // pred_check
          %p201 = pneg %p77
        $region38: #{tpu_custom_call.1} parent=31 // pred_check_branch
          %203 = sbr.rel (%p201) target = $region40
        $region39: #{tpu_custom_call.1} parent=31 // pred_region
          %205 = dma.done [#allocation7], 2048
        $region40: #{tpu_custom_call.1} parent=31 // pred_fallthru
          _
        %s206 = sand.u32 %s43, 1
        %s207 = scalar_lea.sflag [#allocation4], %s206
        %s208 = sand.u32 %s43, 1
        %s209 = smul.addr %s208, 64
        %s210 = scalar_lea.vmem [#allocation3], %s209
        %p211 = pneg %p56
        %p212 = pneg %p53
        %p213 = pneg %p77
        %p214 = pneg %p74
        %p215 = pneg %p98
        %p216 = pneg %p95
        %p217 = pneg %p124
        %p218 = pneg %p121
        %s219 = sand.u32 %s111, 1
        %s220 = scalar_lea.sflag [#allocation5], %s219
        %s221 = sand.u32 %s111, 1
        %s222 = smul.addr %s221, 128
        %s223 = scalar_lea.vmem [#allocation8], %s222
        %s224 = smul.u32 16, %s25
        %s225 = smul.u32 16, %s25
        %p226 = scmp.eq.s32.totalorder %s26, 0
        // Predicated region
        $region41: #{tpu_custom_call.1} parent=31 // pred_check
          %p227 = pneg %p226
        $region42: #{tpu_custom_call.1} parent=31 // pred_check_branch
          %229 = sbr.rel (%p227) target = $region44
        $region43: #{tpu_custom_call.1} parent=31 // pred_region
          %230 = vst [vmem:[#allocation2] sm:$0xff] 0.0
          %231 = vst [vmem:[#allocation2 + $0x8] sm:$0xff] 0.0
          %232 = vst [vmem:[#allocation2 + $0x10] sm:$0xff] 0.0
          %233 = vst [vmem:[#allocation2 + $0x18] sm:$0xff] 0.0
          %234 = vst [vmem:[#allocation2 + $0x20] sm:$0xff] 0.0
          %235 = vst [vmem:[#allocation2 + $0x28] sm:$0xff] 0.0
          %236 = vst [vmem:[#allocation2 + $0x30] sm:$0xff] 0.0
          %237 = vst [vmem:[#allocation2 + $0x38] sm:$0xff] 0.0
          %238 = vst [vmem:[#allocation2 + $0x40] sm:$0xff] 0.0
          %239 = vst [vmem:[#allocation2 + $0x48] sm:$0xff] 0.0
          %240 = vst [vmem:[#allocation2 + $0x50] sm:$0xff] 0.0
          %241 = vst [vmem:[#allocation2 + $0x58] sm:$0xff] 0.0
          %242 = vst [vmem:[#allocation2 + $0x60] sm:$0xff] 0.0
          %243 = vst [vmem:[#allocation2 + $0x68] sm:$0xff] 0.0
          %244 = vst [vmem:[#allocation2 + $0x70] sm:$0xff] 0.0
          %245 = vst [vmem:[#allocation2 + $0x78] sm:$0xff] 0.0
        $region44: #{tpu_custom_call.1} parent=31 // pred_fallthru
          _
        %s246 = smul.u32 %s26, 128
        %s247 = sshra.s32 %s246, 3
        %s248 = sand.u32 %s246, 7
        %s249 = smul.addr %s247, 4
        %s250 = scalar_lea.vmem [#allocation6], %s249
        %v251 = vld [vmem:[%s250] sm:$0xf]
        %v252 = vld [vmem:[%s250 + $0x4] sm:$0xf]
        %v253 = vld [vmem:[%s250 + $0x8] sm:$0xf]
        %v254 = vld [vmem:[%s250 + $0xc] sm:$0xf]
        %v255 = vld [vmem:[%s250 + $0x10] sm:$0xf]
        %v256 = vld [vmem:[%s250 + $0x14] sm:$0xf]
        %v257 = vld [vmem:[%s250 + $0x18] sm:$0xf]
        %v258 = vld [vmem:[%s250 + $0x1c] sm:$0xf]
        %v259 = vld [vmem:[%s250 + $0x20] sm:$0xf]
        %v260 = vld [vmem:[%s250 + $0x24] sm:$0xf]
        %v261 = vld [vmem:[%s250 + $0x28] sm:$0xf]
        %v262 = vld [vmem:[%s250 + $0x2c] sm:$0xf]
        %v263 = vld [vmem:[%s250 + $0x30] sm:$0xf]
        %v264 = vld [vmem:[%s250 + $0x34] sm:$0xf]
        %v265 = vld [vmem:[%s250 + $0x38] sm:$0xf]
        %v266 = vld [vmem:[%s250 + $0x3c] sm:$0xf]
        %v267 = vld [vmem:[#allocation2] sm:$0xff]
        %v268 = vld [vmem:[#allocation2 + $0x8] sm:$0xff]
        %v269 = vld [vmem:[#allocation2 + $0x10] sm:$0xff]
        %v270 = vld [vmem:[#allocation2 + $0x18] sm:$0xff]
        %v271 = vld [vmem:[#allocation2 + $0x20] sm:$0xff]
        %v272 = vld [vmem:[#allocation2 + $0x28] sm:$0xff]
        %v273 = vld [vmem:[#allocation2 + $0x30] sm:$0xff]
        %v274 = vld [vmem:[#allocation2 + $0x38] sm:$0xff]
        %v275 = vld [vmem:[#allocation2 + $0x40] sm:$0xff]
        %v276 = vld [vmem:[#allocation2 + $0x48] sm:$0xff]
        %v277 = vld [vmem:[#allocation2 + $0x50] sm:$0xff]
        %v278 = vld [vmem:[#allocation2 + $0x58] sm:$0xff]
        %v279 = vld [vmem:[#allocation2 + $0x60] sm:$0xff]
        %v280 = vld [vmem:[#allocation2 + $0x68] sm:$0xff]
        %v281 = vld [vmem:[#allocation2 + $0x70] sm:$0xff]
        %v282 = vld [vmem:[#allocation2 + $0x78] sm:$0xff]
        %v283 = vld [vmem:[%s195] sm:$0xf]
        %v284 = vld [vmem:[%s195 + $0x4] sm:$0xf]
        %v285 = vld [vmem:[%s195 + $0x8] sm:$0xf]
        %v286 = vld [vmem:[%s195 + $0xc] sm:$0xf]
        %v287 = vld [vmem:[%s195 + $0x10] sm:$0xf]
        %v288 = vld [vmem:[%s195 + $0x14] sm:$0xf]
        %v289 = vld [vmem:[%s195 + $0x18] sm:$0xf]
        %v290 = vld [vmem:[%s195 + $0x1c] sm:$0xf]
        %v291 = vld [vmem:[%s195 + $0x20] sm:$0xf]
        %v292 = vld [vmem:[%s195 + $0x24] sm:$0xf]
        %v293 = vld [vmem:[%s195 + $0x28] sm:$0xf]
        %v294 = vld [vmem:[%s195 + $0x2c] sm:$0xf]
        %v295 = vld [vmem:[%s195 + $0x30] sm:$0xf]
        %v296 = vld [vmem:[%s195 + $0x34] sm:$0xf]
        %v297 = vld [vmem:[%s195 + $0x38] sm:$0xf]
        %v298 = vld [vmem:[%s195 + $0x3c] sm:$0xf]
        %v315 = vunpack.c.l.b16 %v283
        %v316 = vunpack.c.l.b16 %v284
        %v317 = vunpack.c.l.b16 %v285
        %v318 = vunpack.c.l.b16 %v286
        %v319 = vunpack.c.l.b16 %v287
        %v320 = vunpack.c.l.b16 %v288
        %v321 = vunpack.c.l.b16 %v289
        %v322 = vunpack.c.l.b16 %v290
        %v323 = vunpack.c.l.b16 %v291
        %v324 = vunpack.c.l.b16 %v292
        %v325 = vunpack.c.l.b16 %v293
        %v326 = vunpack.c.l.b16 %v294
        %v327 = vunpack.c.l.b16 %v295
        %v328 = vunpack.c.l.b16 %v296
        %v329 = vunpack.c.l.b16 %v297
        %v330 = vunpack.c.l.b16 %v298
        %v331 = vpack.c.b16 %v316, %v315
        %v332 = vpack.c.b16 %v318, %v317
        %v333 = vpack.c.b16 %v320, %v319
        %v334 = vpack.c.b16 %v322, %v321
        %v335 = vpack.c.b16 %v324, %v323
        %v336 = vpack.c.b16 %v326, %v325
        %v337 = vpack.c.b16 %v328, %v327
        %v338 = vpack.c.b16 %v330, %v329
        %v363 = vunpack.c.l.b16 %v251
        %v364 = vunpack.c.l.b16 %v252
        %v365 = vunpack.c.l.b16 %v253
        %v366 = vunpack.c.l.b16 %v254
        %v367 = vunpack.c.l.b16 %v255
        %v368 = vunpack.c.l.b16 %v256
        %v369 = vunpack.c.l.b16 %v257
        %v370 = vunpack.c.l.b16 %v258
        %v371 = vunpack.c.l.b16 %v259
        %v372 = vunpack.c.l.b16 %v260
        %v373 = vunpack.c.l.b16 %v261
        %v374 = vunpack.c.l.b16 %v262
        %v375 = vunpack.c.l.b16 %v263
        %v376 = vunpack.c.l.b16 %v264
        %v377 = vunpack.c.l.b16 %v265
        %v378 = vunpack.c.l.b16 %v266
        %v379 = vpack.c.b16 %v364, %v363
        %v380 = vpack.c.b16 %v366, %v365
        %v381 = vpack.c.b16 %v368, %v367
        %v382 = vpack.c.b16 %v370, %v369
        %v383 = vpack.c.b16 %v372, %v371
        %v384 = vpack.c.b16 %v374, %v373
        %v385 = vpack.c.b16 %v376, %v375
        %v386 = vpack.c.b16 %v378, %v377
        %395 = vmatpush.bf16.msra.mxu0 %v386
        %396 = vmatpush.bf16.msra.mxu0 %v385
        %397 = vmatpush.bf16.msra.mxu0 %v384
        %398 = vmatpush.bf16.msra.mxu0 %v383
        %399 = vmatpush.bf16.msra.mxu0 %v382
        %400 = vmatpush.bf16.msra.mxu0 %v381
        %401 = vmatpush.bf16.msra.mxu0 %v380
        %402 = vmatpush.bf16.msra.mxu0 %v379
        %403 = vmatmul.bf16.gmra.mxu0 %v331
        %v404 = vpop.f32.mrf.mxu0
        %v405 = vadd.f32 0.0, %v404
        %v406 = vpop.f32.mrf.mxu0
        %v407 = vadd.f32 0.0, %v406
        %408 = vmatmul.bf16.gmra.mxu0 %v332
        %v409 = vpop.f32.mrf.mxu0
        %v410 = vadd.f32 0.0, %v409
        %v411 = vpop.f32.mrf.mxu0
        %v412 = vadd.f32 0.0, %v411
        %413 = vmatmul.bf16.gmra.mxu0 %v333
        %v414 = vpop.f32.mrf.mxu0
        %v415 = vadd.f32 0.0, %v414
        %v416 = vpop.f32.mrf.mxu0
        %v417 = vadd.f32 0.0, %v416
        %418 = vmatmul.bf16.gmra.mxu0 %v334
        %v419 = vpop.f32.mrf.mxu0
        %v420 = vadd.f32 0.0, %v419
        %v421 = vpop.f32.mrf.mxu0
        %v422 = vadd.f32 0.0, %v421
        %423 = vmatmul.bf16.gmra.mxu0 %v335
        %v424 = vpop.f32.mrf.mxu0
        %v425 = vadd.f32 0.0, %v424
        %v426 = vpop.f32.mrf.mxu0
        %v427 = vadd.f32 0.0, %v426
        %428 = vmatmul.bf16.gmra.mxu0 %v336
        %v429 = vpop.f32.mrf.mxu0
        %v430 = vadd.f32 0.0, %v429
        %v431 = vpop.f32.mrf.mxu0
        %v432 = vadd.f32 0.0, %v431
        %433 = vmatmul.bf16.gmra.mxu0 %v337
        %v434 = vpop.f32.mrf.mxu0
        %v435 = vadd.f32 0.0, %v434
        %v436 = vpop.f32.mrf.mxu0
        %v437 = vadd.f32 0.0, %v436
        %438 = vmatmul.bf16.gmra.mxu0 %v338
        %v439 = vpop.f32.mrf.mxu0
        %v440 = vadd.f32 0.0, %v439
        %v441 = vpop.f32.mrf.mxu0
        %v442 = vadd.f32 0.0, %v441
        %443 = vdwg.mxu0
        %v444 = vadd.f32 %v267, %v405
        %v445 = vadd.f32 %v268, %v407
        %v446 = vadd.f32 %v269, %v410
        %v447 = vadd.f32 %v270, %v412
        %v448 = vadd.f32 %v271, %v415
        %v449 = vadd.f32 %v272, %v417
        %v450 = vadd.f32 %v273, %v420
        %v451 = vadd.f32 %v274, %v422
        %v452 = vadd.f32 %v275, %v425
        %v453 = vadd.f32 %v276, %v427
        %v454 = vadd.f32 %v277, %v430
        %v455 = vadd.f32 %v278, %v432
        %v456 = vadd.f32 %v279, %v435
        %v457 = vadd.f32 %v280, %v437
        %v458 = vadd.f32 %v281, %v440
        %v459 = vadd.f32 %v282, %v442
        %460 = vst [vmem:[#allocation2] sm:$0xff] %v444
        %461 = vst [vmem:[#allocation2 + $0x8] sm:$0xff] %v445
        %462 = vst [vmem:[#allocation2 + $0x10] sm:$0xff] %v446
        %463 = vst [vmem:[#allocation2 + $0x18] sm:$0xff] %v447
        %464 = vst [vmem:[#allocation2 + $0x20] sm:$0xff] %v448
        %465 = vst [vmem:[#allocation2 + $0x28] sm:$0xff] %v449
        %466 = vst [vmem:[#allocation2 + $0x30] sm:$0xff] %v450
        %467 = vst [vmem:[#allocation2 + $0x38] sm:$0xff] %v451
        %468 = vst [vmem:[#allocation2 + $0x40] sm:$0xff] %v452
        %469 = vst [vmem:[#allocation2 + $0x48] sm:$0xff] %v453
        %470 = vst [vmem:[#allocation2 + $0x50] sm:$0xff] %v454
        %471 = vst [vmem:[#allocation2 + $0x58] sm:$0xff] %v455
        %472 = vst [vmem:[#allocation2 + $0x60] sm:$0xff] %v456
        %473 = vst [vmem:[#allocation2 + $0x68] sm:$0xff] %v457
        %474 = vst [vmem:[#allocation2 + $0x70] sm:$0xff] %v458
        %475 = vst [vmem:[#allocation2 + $0x78] sm:$0xff] %v459
        %p476 = scmp.eq.s32.totalorder %s26, 1
        // Predicated region
        $region45: #{tpu_custom_call.1} parent=31 // pred_check
          %p477 = pneg %p476
        $region46: #{tpu_custom_call.1} parent=31 // pred_check_branch
          %479 = sbr.rel (%p477) target = $region48
        $region47: #{tpu_custom_call.1} parent=31 // pred_region
          %v480 = vld [vmem:[#allocation2] sm:$0xff]
          %v481 = vld [vmem:[#allocation2 + $0x8] sm:$0xff]
          %v482 = vld [vmem:[#allocation2 + $0x10] sm:$0xff]
          %v483 = vld [vmem:[#allocation2 + $0x18] sm:$0xff]
          %v484 = vld [vmem:[#allocation2 + $0x20] sm:$0xff]
          %v485 = vld [vmem:[#allocation2 + $0x28] sm:$0xff]
          %v486 = vld [vmem:[#allocation2 + $0x30] sm:$0xff]
          %v487 = vld [vmem:[#allocation2 + $0x38] sm:$0xff]
          %v488 = vld [vmem:[#allocation2 + $0x40] sm:$0xff]
          %v489 = vld [vmem:[#allocation2 + $0x48] sm:$0xff]
          %v490 = vld [vmem:[#allocation2 + $0x50] sm:$0xff]
          %v491 = vld [vmem:[#allocation2 + $0x58] sm:$0xff]
          %v492 = vld [vmem:[#allocation2 + $0x60] sm:$0xff]
          %v493 = vld [vmem:[#allocation2 + $0x68] sm:$0xff]
          %v494 = vld [vmem:[#allocation2 + $0x70] sm:$0xff]
          %v495 = vld [vmem:[#allocation2 + $0x78] sm:$0xff]
          %v496 = vmax.f32 %v480, 1.0
          %v497 = vmax.f32 %v481, 1.0
          %v498 = vmax.f32 %v482, 1.0
          %v499 = vmax.f32 %v483, 1.0
          %v500 = vmax.f32 %v484, 1.0
          %v501 = vmax.f32 %v485, 1.0
          %v502 = vmax.f32 %v486, 1.0
          %v503 = vmax.f32 %v487, 1.0
          %v504 = vmax.f32 %v488, 1.0
          %v505 = vmax.f32 %v489, 1.0
          %v506 = vmax.f32 %v490, 1.0
          %v507 = vmax.f32 %v491, 1.0
          %v508 = vmax.f32 %v492, 1.0
          %v509 = vmax.f32 %v493, 1.0
          %v510 = vmax.f32 %v494, 1.0
          %v511 = vmax.f32 %v495, 1.0
          %v512 = vrsqrt.pop %v496
          %v513 = vmul.f32 %v512, %v496
          %v514 = vmul.f32 %v513, %v512
          %v515 = vmul.f32 0.5, %v514
          %v516 = vsub.f32 1.5, %v515
          %v517 = vmul.f32 %v512, %v516
          %vm518 = vweird.f32 %v496
          %vm519 = vweird.f32 %v512
          %vm520 = vmor %vm518, %vm519
          %v521 = vsel %vm520, %v512, %v517
          %v522 = vrsqrt.pop %v497
          %v523 = vmul.f32 %v522, %v497
          %v524 = vmul.f32 %v523, %v522
          %v525 = vmul.f32 0.5, %v524
          %v526 = vsub.f32 1.5, %v525
          %v527 = vmul.f32 %v522, %v526
          %vm528 = vweird.f32 %v497
          %vm529 = vweird.f32 %v522
          %vm530 = vmor %vm528, %vm529
          %v531 = vsel %vm530, %v522, %v527
          %v532 = vrsqrt.pop %v498
          %v533 = vmul.f32 %v532, %v498
          %v534 = vmul.f32 %v533, %v532
          %v535 = vmul.f32 0.5, %v534
          %v536 = vsub.f32 1.5, %v535
          %v537 = vmul.f32 %v532, %v536
          %vm538 = vweird.f32 %v498
          %vm539 = vweird.f32 %v532
          %vm540 = vmor %vm538, %vm539
          %v541 = vsel %vm540, %v532, %v537
          %v542 = vrsqrt.pop %v499
          %v543 = vmul.f32 %v542, %v499
          %v544 = vmul.f32 %v543, %v542
          %v545 = vmul.f32 0.5, %v544
          %v546 = vsub.f32 1.5, %v545
          %v547 = vmul.f32 %v542, %v546
          %vm548 = vweird.f32 %v499
          %vm549 = vweird.f32 %v542
          %vm550 = vmor %vm548, %vm549
          %v551 = vsel %vm550, %v542, %v547
          %v552 = vrsqrt.pop %v500
          %v553 = vmul.f32 %v552, %v500
          %v554 = vmul.f32 %v553, %v552
          %v555 = vmul.f32 0.5, %v554
          %v556 = vsub.f32 1.5, %v555
          %v557 = vmul.f32 %v552, %v556
          %vm558 = vweird.f32 %v500
          %vm559 = vweird.f32 %v552
          %vm560 = vmor %vm558, %vm559
          %v561 = vsel %vm560, %v552, %v557
          %v562 = vrsqrt.pop %v501
          %v563 = vmul.f32 %v562, %v501
          %v564 = vmul.f32 %v563, %v562
          %v565 = vmul.f32 0.5, %v564
          %v566 = vsub.f32 1.5, %v565
          %v567 = vmul.f32 %v562, %v566
          %vm568 = vweird.f32 %v501
          %vm569 = vweird.f32 %v562
          %vm570 = vmor %vm568, %vm569
          %v571 = vsel %vm570, %v562, %v567
          %v572 = vrsqrt.pop %v502
          %v573 = vmul.f32 %v572, %v502
          %v574 = vmul.f32 %v573, %v572
          %v575 = vmul.f32 0.5, %v574
          %v576 = vsub.f32 1.5, %v575
          %v577 = vmul.f32 %v572, %v576
          %vm578 = vweird.f32 %v502
          %vm579 = vweird.f32 %v572
          %vm580 = vmor %vm578, %vm579
          %v581 = vsel %vm580, %v572, %v577
          %v582 = vrsqrt.pop %v503
          %v583 = vmul.f32 %v582, %v503
          %v584 = vmul.f32 %v583, %v582
          %v585 = vmul.f32 0.5, %v584
          %v586 = vsub.f32 1.5, %v585
          %v587 = vmul.f32 %v582, %v586
          %vm588 = vweird.f32 %v503
          %vm589 = vweird.f32 %v582
          %vm590 = vmor %vm588, %vm589
          %v591 = vsel %vm590, %v582, %v587
          %v592 = vrsqrt.pop %v504
          %v593 = vmul.f32 %v592, %v504
          %v594 = vmul.f32 %v593, %v592
          %v595 = vmul.f32 0.5, %v594
          %v596 = vsub.f32 1.5, %v595
          %v597 = vmul.f32 %v592, %v596
          %vm598 = vweird.f32 %v504
          %vm599 = vweird.f32 %v592
          %vm600 = vmor %vm598, %vm599
          %v601 = vsel %vm600, %v592, %v597
          %v602 = vrsqrt.pop %v505
          %v603 = vmul.f32 %v602, %v505
          %v604 = vmul.f32 %v603, %v602
          %v605 = vmul.f32 0.5, %v604
          %v606 = vsub.f32 1.5, %v605
          %v607 = vmul.f32 %v602, %v606
          %vm608 = vweird.f32 %v505
          %vm609 = vweird.f32 %v602
          %vm610 = vmor %vm608, %vm609
          %v611 = vsel %vm610, %v602, %v607
          %v612 = vrsqrt.pop %v506
          %v613 = vmul.f32 %v612, %v506
          %v614 = vmul.f32 %v613, %v612
          %v615 = vmul.f32 0.5, %v614
          %v616 = vsub.f32 1.5, %v615
          %v617 = vmul.f32 %v612, %v616
          %vm618 = vweird.f32 %v506
          %vm619 = vweird.f32 %v612
          %vm620 = vmor %vm618, %vm619
          %v621 = vsel %vm620, %v612, %v617
          %v622 = vrsqrt.pop %v507
          %v623 = vmul.f32 %v622, %v507
          %v624 = vmul.f32 %v623, %v622
          %v625 = vmul.f32 0.5, %v624
          %v626 = vsub.f32 1.5, %v625
          %v627 = vmul.f32 %v622, %v626
          %vm628 = vweird.f32 %v507
          %vm629 = vweird.f32 %v622
          %vm630 = vmor %vm628, %vm629
          %v631 = vsel %vm630, %v622, %v627
          %v632 = vrsqrt.pop %v508
          %v633 = vmul.f32 %v632, %v508
          %v634 = vmul.f32 %v633, %v632
          %v635 = vmul.f32 0.5, %v634
          %v636 = vsub.f32 1.5, %v635
          %v637 = vmul.f32 %v632, %v636
          %vm638 = vweird.f32 %v508
          %vm639 = vweird.f32 %v632
          %vm640 = vmor %vm638, %vm639
          %v641 = vsel %vm640, %v632, %v637
          %v642 = vrsqrt.pop %v509
          %v643 = vmul.f32 %v642, %v509
          %v644 = vmul.f32 %v643, %v642
          %v645 = vmul.f32 0.5, %v644
          %v646 = vsub.f32 1.5, %v645
          %v647 = vmul.f32 %v642, %v646
          %vm648 = vweird.f32 %v509
          %vm649 = vweird.f32 %v642
          %vm650 = vmor %vm648, %vm649
          %v651 = vsel %vm650, %v642, %v647
          %v652 = vrsqrt.pop %v510
          %v653 = vmul.f32 %v652, %v510
          %v654 = vmul.f32 %v653, %v652
          %v655 = vmul.f32 0.5, %v654
          %v656 = vsub.f32 1.5, %v655
          %v657 = vmul.f32 %v652, %v656
          %vm658 = vweird.f32 %v510
          %vm659 = vweird.f32 %v652
          %vm660 = vmor %vm658, %vm659
          %v661 = vsel %vm660, %v652, %v657
          %v662 = vrsqrt.pop %v511
          %v663 = vmul.f32 %v662, %v511
          %v664 = vmul.f32 %v663, %v662
          %v665 = vmul.f32 0.5, %v664
          %v666 = vsub.f32 1.5, %v665
          %v667 = vmul.f32 %v662, %v666
          %vm668 = vweird.f32 %v511
          %vm669 = vweird.f32 %v662
          %vm670 = vmor %vm668, %vm669
          %v671 = vsel %vm670, %v662, %v667
          %673 = vset.pattern.permute.xlu0 16
          %674 = vperm.xlu0 %673, %v521
          %v675 = vpop.permute.xlu0 %674
          %678 = vset.pattern.permute.xlu0 16
          %679 = vperm.xlu0 %678, %v531
          %v680 = vpop.permute.xlu0 %679
          %683 = vset.pattern.permute.xlu0 16
          %684 = vperm.xlu0 %683, %v541
          %v685 = vpop.permute.xlu0 %684
          %688 = vset.pattern.permute.xlu0 16
          %689 = vperm.xlu0 %688, %v551
          %v690 = vpop.permute.xlu0 %689
          %693 = vset.pattern.permute.xlu0 16
          %694 = vperm.xlu0 %693, %v561
          %v695 = vpop.permute.xlu0 %694
          %698 = vset.pattern.permute.xlu0 16
          %699 = vperm.xlu0 %698, %v571
          %v700 = vpop.permute.xlu0 %699
          %703 = vset.pattern.permute.xlu0 16
          %704 = vperm.xlu0 %703, %v581
          %v705 = vpop.permute.xlu0 %704
          %708 = vset.pattern.permute.xlu0 16
          %709 = vperm.xlu0 %708, %v591
          %v710 = vpop.permute.xlu0 %709
          %713 = vset.pattern.permute.xlu0 16
          %714 = vperm.xlu0 %713, %v601
          %v715 = vpop.permute.xlu0 %714
          %718 = vset.pattern.permute.xlu0 16
          %719 = vperm.xlu0 %718, %v611
          %v720 = vpop.permute.xlu0 %719
          %723 = vset.pattern.permute.xlu0 16
          %724 = vperm.xlu0 %723, %v621
          %v725 = vpop.permute.xlu0 %724
          %728 = vset.pattern.permute.xlu0 16
          %729 = vperm.xlu0 %728, %v631
          %v730 = vpop.permute.xlu0 %729
          %733 = vset.pattern.permute.xlu0 16
          %734 = vperm.xlu0 %733, %v641
          %v735 = vpop.permute.xlu0 %734
          %738 = vset.pattern.permute.xlu0 16
          %739 = vperm.xlu0 %738, %v651
          %v740 = vpop.permute.xlu0 %739
          %743 = vset.pattern.permute.xlu0 16
          %744 = vperm.xlu0 %743, %v661
          %v745 = vpop.permute.xlu0 %744
          %748 = vset.pattern.permute.xlu0 16
          %749 = vperm.xlu0 %748, %v671
          %v750 = vpop.permute.xlu0 %749
          %v752 = vmul.f32 %v480, %v675
          %v753 = vmul.f32 %v481, %v680
          %v754 = vmul.f32 %v482, %v685
          %v755 = vmul.f32 %v483, %v690
          %v756 = vmul.f32 %v484, %v695
          %v757 = vmul.f32 %v485, %v700
          %v758 = vmul.f32 %v486, %v705
          %v759 = vmul.f32 %v487, %v710
          %v760 = vmul.f32 %v488, %v715
          %v761 = vmul.f32 %v489, %v720
          %v762 = vmul.f32 %v490, %v725
          %v763 = vmul.f32 %v491, %v730
          %v764 = vmul.f32 %v492, %v735
          %v765 = vmul.f32 %v493, %v740
          %v766 = vmul.f32 %v494, %v745
          %v767 = vmul.f32 %v495, %v750
          %v768 = vld [vmem:[%s2] sm:$0x1]
          %v770 = vperm.slane %v768, 0
          %v772 = vadd.f32 %v752, %v770
          %v773 = vadd.f32 %v753, %v770
          %v774 = vadd.f32 %v754, %v770
          %v775 = vadd.f32 %v755, %v770
          %v776 = vadd.f32 %v756, %v770
          %v777 = vadd.f32 %v757, %v770
          %v778 = vadd.f32 %v758, %v770
          %v779 = vadd.f32 %v759, %v770
          %v780 = vadd.f32 %v760, %v770
          %v781 = vadd.f32 %v761, %v770
          %v782 = vadd.f32 %v762, %v770
          %v783 = vadd.f32 %v763, %v770
          %v784 = vadd.f32 %v764, %v770
          %v785 = vadd.f32 %v765, %v770
          %v786 = vadd.f32 %v766, %v770
          %v787 = vadd.f32 %v767, %v770
          %788 = vst [vmem:[%s223] sm:$0xff] %v772
          %789 = vst [vmem:[%s223 + $0x8] sm:$0xff] %v773
          %790 = vst [vmem:[%s223 + $0x10] sm:$0xff] %v774
          %791 = vst [vmem:[%s223 + $0x18] sm:$0xff] %v775
          %792 = vst [vmem:[%s223 + $0x20] sm:$0xff] %v776
          %793 = vst [vmem:[%s223 + $0x28] sm:$0xff] %v777
          %794 = vst [vmem:[%s223 + $0x30] sm:$0xff] %v778
          %795 = vst [vmem:[%s223 + $0x38] sm:$0xff] %v779
          %796 = vst [vmem:[%s223 + $0x40] sm:$0xff] %v780
          %797 = vst [vmem:[%s223 + $0x48] sm:$0xff] %v781
          %798 = vst [vmem:[%s223 + $0x50] sm:$0xff] %v782
          %799 = vst [vmem:[%s223 + $0x58] sm:$0xff] %v783
          %800 = vst [vmem:[%s223 + $0x60] sm:$0xff] %v784
          %801 = vst [vmem:[%s223 + $0x68] sm:$0xff] %v785
          %802 = vst [vmem:[%s223 + $0x70] sm:$0xff] %v786
          %803 = vst [vmem:[%s223 + $0x78] sm:$0xff] %v787
        $region48: #{tpu_custom_call.1} parent=31 // pred_fallthru
          _
        %s804 = sand.u32 %s111, 1
        %s805 = scalar_lea.sflag [#allocation5], %s804
        %s806 = sand.u32 %s111, 1
        %s807 = smul.addr %s806, 128
        %s808 = scalar_lea.vmem [#allocation8], %s807
        // Predicated region
        $region49: #{tpu_custom_call.1} parent=31 // pred_check
          %p809 = pneg %p121
        $region50: #{tpu_custom_call.1} parent=31 // pred_check_branch
          %811 = sbr.rel (%p809) target = $region52
        $region51: #{tpu_custom_call.1} parent=31 // pred_region
          %s812 = smul.u32 16, %s25
          %814 = vsyncadd %s805, 0
          %s815 = smul.addr %s812, 8
          %s816 = scalar_lea.hbm %s3, %s815
          %s817 = sshll.u32 %s808, 4
          %s818 = int_to_ptr.vmem [resolvable:$true] %s817
          %s819 = sshll.u32 %s816, 4
          %s820 = int_to_ptr.hbm [resolvable:$true] %s819
          %825 = dma.vmem_to_hbm [thread:$0]  %s818, 2048, %s820, %s805, 128, 128, 8
        $region52: #{tpu_custom_call.1} parent=31 // pred_fallthru
          _
      $region32: #{tpu_custom_call.1} parent=5 // pred_fallthru
        _
      %p826 = scmp.le.s32.totalorder 2, %s16
      // Predicated region
      $region53: #{tpu_custom_call.1} parent=5 // pred_check
        %p827 = pneg %p826
      $region54: #{tpu_custom_call.1} parent=5 // pred_check_branch
        %829 = sbr.rel (%p827) target = $region56
      $region55: #{tpu_custom_call.1} parent=5 // pred_region
        %s830 = ssub.s32 %s16, 2
        // Predicated region
        $region57: #{tpu_custom_call.1} parent=55 // pred_check
          %p831 = pneg %p127
        $region58: #{tpu_custom_call.1} parent=55 // pred_check_branch
          %833 = sbr.rel (%p831) target = $region60
        $region59: #{tpu_custom_call.1} parent=55 // pred_region
          %s834 = sand.u32 %s112, 1
          %s835 = scalar_lea.sflag [#allocation5], %s834
          %s836 = sand.u32 %s112, 1
          %s837 = smul.addr %s836, 128
          %s838 = scalar_lea.vmem [#allocation8], %s837
          %840 = dma.done %s835, 2048
        $region60: #{tpu_custom_call.1} parent=55 // pred_fallthru
          _
      $region56: #{tpu_custom_call.1} parent=5 // pred_fallthru
        _
    $region6: #{tpu_custom_call.1} parent=1 // loop_footer
      %s20 = sadd.s32 1, %s16
    $region7: #{tpu_custom_call.1} parent=1 // loop_footer_branch
      %15 = sbr.rel target = $region3
    $region8: #{tpu_custom_call.1} parent=1 // loop_exit
      _
    %841 = vsyncpa [#allocation4], 1
    %s842 = scalar_lea.sflag [#allocation4], 1
    %843 = vsyncpa %s842, 1
    %844 = vsyncpa [#allocation7], 1
    %845 = vsyncpa [#allocation5], 1
    %s846 = scalar_lea.sflag [#allocation5], 1
    %847 = vsyncpa %s846, 1

</llo_original>
